<compile_context>
chip_gen: v6e
topology: v6e:2x2x1
jax: 0.10.0
libtpu: 0.0.40
codegen_flags: <defaults>
</compile_context>

<pallas_src>
import functools

import jax
import jax.numpy as jnp
from jax.experimental import pallas as pl
from jax.experimental.pallas import tpu as pltpu


def _ce_label_smooth_kernel(x_ref, t_ref, o_ref, *, epsilon, num_classes, batch, tile_b):
    i = pl.program_id(0)

    # (TB, C) block of logits in native dtype (bf16 stays bf16 for max/sub).
    x = x_ref[...]

    # Row max (numerical stabilizer for the exp).
    m = jnp.max(x, axis=1, keepdims=True)                        # (TB, 1)

    # Single f32 (TB, C) temporary reused by both lane reductions below.
    xm = (x - m).astype(jnp.float32)                             # (TB, C)

    # Shifted softmax denominator: s_i = sum_c exp(x_ic - m_i).
    s = jnp.sum(jnp.exp(xm), axis=1, keepdims=True)              # (TB, 1)

    # Fused target-gather + uniform-smoothing reduction.
    #   w_c = (1-eps)+eps/C at the target class, eps/C elsewhere; sum_c w_c = 1,
    #   so the row max cancels and
    #   loss_i = log(s_i) - sum_c w_c * (x_ic - m_i)
    off = epsilon / num_classes
    on = (1.0 - epsilon) + off
    class_ids = jax.lax.broadcasted_iota(jnp.int32, x.shape, 1)  # (TB, C)
    w = jnp.where(class_ids == t_ref[...], on, off)              # (TB, C) f32
    smooth = jnp.sum(xm * w, axis=1, keepdims=True)              # (TB, 1)

    loss_rows = jnp.log(s) - smooth                              # (TB, 1)

    # Mask rows of the (possibly partial) last block: global row index >= N.
    # jnp.where is a select, so NaN/inf from garbage rows does not propagate.
    row_ids = i * tile_b + jax.lax.broadcasted_iota(jnp.int32, loss_rows.shape, 0)
    loss_rows = jnp.where(row_ids < batch, loss_rows, 0.0)

    partial = jnp.sum(loss_rows)

    # Lane-dense per-tile partial sum; wrapper reads [:, 0, 0] and divides by N.
    o_ref[...] = jnp.broadcast_to(partial, o_ref.shape).astype(o_ref.dtype)


def _round_up(x, m):
    return ((x + m - 1) // m) * m


def _vmem_capacity_bytes():
    try:
        return int(pltpu.get_tpu_info().vmem_capacity_bytes)
    except Exception:
        return 64 * 1024 * 1024  # conservative: v7x per-TensorCore VMEM


def _choose_tiling(n, c, itemsize):
    """Return (tile_b, vmem_limit_bytes), generation-aware.

    vmem_limit: ~75% of physical VMEM (<=48 MiB on v7x, <=96 MiB on v5e/v6e).
    tile_b: largest 16-aligned batch tile whose double-buffered input block plus
    f32/i32 temporaries fit in ~40% of that limit (multi-MiB DMA blocks).
    """
    cap = _vmem_capacity_bytes()
    vmem_limit = min(int(cap * 0.75), 96 * 1024 * 1024)
    tile_budget = int(vmem_limit * 0.4)
    per_row = c * (2 * itemsize + 16)       # 2x input buffers + f32 xm/w + i32 iota
    tb = max(16, tile_budget // per_row)
    tb = min(tb, 4096)
    tb = min(tb, _round_up(n, 16))          # don't pick a tile far larger than N
    tb = max(16, (tb // 16) * 16)
    return int(tb), int(vmem_limit)


def cross_entropy_label_smooth(inputs, targets, *, num_classes, epsilon, tile_b=None):
    """inputs: (N, C) float logits; targets: (N,) int labels -> scalar f32 loss."""
    n, c = inputs.shape
    assert c == num_classes

    itemsize = jnp.dtype(inputs.dtype).itemsize
    auto_tb, vmem_limit = _choose_tiling(n, c, itemsize)
    if tile_b is None:
        tile_b = auto_tb
    else:
        tile_b = max(16, (int(tile_b) // 16) * 16)

    num_tiles = pl.cdiv(n, tile_b)

    # Do NOT pad the logits (that would be a full extra HBM read+write of the
    # (N, C) array). The last grid block is partial and masked in-kernel.
    # Only pad the tiny int32 target column so its blocks divide evenly.
    n_pad = num_tiles * tile_b
    targets_col = targets.astype(jnp.int32).reshape(n, 1)
    if n_pad != n:
        targets_col = jnp.pad(targets_col, ((0, n_pad - n), (0, 0)))

    kernel = functools.partial(
        _ce_label_smooth_kernel,
        epsilon=float(epsilon),
        num_classes=int(num_classes),
        batch=int(n),
        tile_b=int(tile_b),
    )

    partials = pl.pallas_call(
        kernel,
        out_shape=jax.ShapeDtypeStruct((num_tiles, 8, 128), jnp.float32),
        grid_spec=pltpu.PrefetchScalarGridSpec(
            num_scalar_prefetch=0,
            grid=(num_tiles,),
            in_specs=[
                pl.BlockSpec((tile_b, c), lambda i: (i, 0)),
                pl.BlockSpec((tile_b, 1), lambda i: (i, 0)),
            ],
            out_specs=pl.BlockSpec((1, 8, 128), lambda i: (i, 0, 0)),
        ),
        compiler_params=pltpu.CompilerParams(
            dimension_semantics=("parallel",),      # independent tiles -> megacore OK
            vmem_limit_bytes=vmem_limit,
        ),
    )(inputs, targets_col)

    # Each tile's block is a broadcast of its scalar partial; take one lane.
    return partials[:, 0, 0].sum() / n


def _reference(inputs, targets, num_classes, epsilon):
    x = inputs.astype(jnp.float32)
    log_probs = jax.nn.log_softmax(x, axis=1)
    one_hot = jax.nn.one_hot(targets, num_classes, dtype=jnp.float32)
    smooth = (1.0 - epsilon) * one_hot + epsilon / num_classes
    return (-smooth * log_probs).mean(0).sum()


if __name__ == "__main__":
    num_classes = 128
    epsilon = 0.1
    batch = 16

    key = jax.random.PRNGKey(0)
    k_x, k_t = jax.random.split(key)
    inputs = jax.random.normal(k_x, (batch, num_classes), dtype=jnp.float32)
    targets = jax.random.randint(k_t, (batch,), 0, num_classes, dtype=jnp.int32)

    loss = cross_entropy_label_smooth(
        inputs, targets, num_classes=num_classes, epsilon=epsilon
    )
    loss = jax.block_until_ready(loss)
    ref = _reference(inputs, targets, num_classes, epsilon)
    assert jnp.allclose(loss, ref, rtol=1e-5, atol=1e-5), (loss, ref)

    # Ragged batch (exercises the partial last block + in-kernel row mask,
    # with NO padding of the logits).
    batch2 = 13
    inputs2 = jax.random.normal(k_x, (batch2, num_classes), dtype=jnp.float32)
    targets2 = jax.random.randint(k_t, (batch2,), 0, num_classes, dtype=jnp.int32)
    loss2 = jax.block_until_ready(
        cross_entropy_label_smooth(
            inputs2, targets2, num_classes=num_classes, epsilon=epsilon
        )
    )
    ref2 = _reference(inputs2, targets2, num_classes, epsilon)
    assert jnp.allclose(loss2, ref2, rtol=1e-5, atol=1e-5), (loss2, ref2)

    # bf16 logits path (in-kernel max/sub in bf16, single f32 temp).
    inputs3 = inputs.astype(jnp.bfloat16)
    loss3 = jax.block_until_ready(
        cross_entropy_label_smooth(
            inputs3, targets, num_classes=num_classes, epsilon=epsilon
        )
    )
    ref3 = _reference(inputs3.astype(jnp.float32), targets, num_classes, epsilon)
    assert jnp.allclose(loss3, ref3, rtol=2e-2, atol=2e-2), (loss3, ref3)

    print("KERNEL_OK")
</pallas_src>

<mosaic_0001>
module attributes {stable_mosaic.version = 11 : i64} {
  func.func @_ce_label_smooth_kernel(%arg0: i32, %arg1: memref<16x128xf32, #tpu.memory_space<vmem>>, %arg2: memref<16x1xi32, #tpu.memory_space<vmem>>, %arg3: memref<1x8x128xf32, #tpu.memory_space<vmem>>) attributes {dimension_semantics = [#tpu.dimension_semantics<parallel>], iteration_bounds = array<i64: 1>, scalar_prefetch = 0 : i64, scratch_operands = 0 : i64, tpu.core_type = #tpu.core_type<tc>, window_params = [{transform_indices = @transform_0, window_bounds = array<i64: 16, 128>}, {transform_indices = @transform_1, window_bounds = array<i64: 16, 1>}, {transform_indices = @transform_2, window_bounds = array<i64: 1, 8, 128>}]} {
    %c0 = arith.constant 0 : index
    %c0_0 = arith.constant 0 : index
    %0 = vector.load %arg1[%c0, %c0_0] : memref<16x128xf32, #tpu.memory_space<vmem>>, vector<16x128xf32>
    %cst = arith.constant dense<0xFF800000> : vector<16xf32>
    %1 = vector.multi_reduction <maximumf>, %0, %cst [1] : vector<16x128xf32> to vector<16xf32>
    %2 = vector.shape_cast %1 : vector<16xf32> to vector<16x1xf32>
    %3 = vector.broadcast %2 : vector<16x1xf32> to vector<16x128xf32>
    %4 = arith.subf %0, %3 : vector<16x128xf32>
    %5 = math.exp %4 : vector<16x128xf32>
    %cst_1 = arith.constant dense<0.000000e+00> : vector<16xf32>
    %6 = vector.multi_reduction <add>, %5, %cst_1 [1] : vector<16x128xf32> to vector<16xf32>
    %7 = vector.shape_cast %6 : vector<16xf32> to vector<16x1xf32>
    %8 = tpu.iota {dimensions = array<i32: 1>} : vector<16x128xi32>
    %c0_2 = arith.constant 0 : index
    %c0_3 = arith.constant 0 : index
    %9 = vector.load %arg2[%c0_2, %c0_3] : memref<16x1xi32, #tpu.memory_space<vmem>>, vector<16x1xi32>
    %10 = vector.broadcast %9 : vector<16x1xi32> to vector<16x128xi32>
    %11 = arith.cmpi eq, %8, %10 : vector<16x128xi32>
    %cst_4 = arith.constant 0.900781273 : f32
    %cst_5 = arith.constant 7.812500e-04 : f32
    %12 = vector.broadcast %cst_4 : f32 to vector<16x128xf32>
    %13 = vector.broadcast %cst_5 : f32 to vector<16x128xf32>
    %14 = arith.select %11, %12, %13 : vector<16x128xi1>, vector<16x128xf32>
    %15 = arith.mulf %4, %14 : vector<16x128xf32>
    %cst_6 = arith.constant dense<0.000000e+00> : vector<16xf32>
    %16 = vector.multi_reduction <add>, %15, %cst_6 [1] : vector<16x128xf32> to vector<16xf32>
    %17 = vector.shape_cast %16 : vector<16xf32> to vector<16x1xf32>
    %18 = math.log %7 : vector<16x1xf32>
    %19 = arith.subf %18, %17 : vector<16x1xf32>
    %c16_i32 = arith.constant 16 : i32
    %20 = arith.muli %arg0, %c16_i32 : i32
    %21 = tpu.iota {dimensions = array<i32: 0>} : vector<16x1xi32>
    %22 = vector.broadcast %20 : i32 to vector<16x1xi32>
    %23 = arith.addi %22, %21 : vector<16x1xi32>
    %c16_i32_7 = arith.constant 16 : i32
    %24 = vector.broadcast %c16_i32_7 : i32 to vector<16x1xi32>
    %25 = arith.cmpi slt, %23, %24 : vector<16x1xi32>
    %cst_8 = arith.constant 0.000000e+00 : f32
    %26 = vector.broadcast %cst_8 : f32 to vector<16x1xf32>
    %27 = arith.select %25, %19, %26 : vector<16x1xi1>, vector<16x1xf32>
    %28 = vector.shape_cast %27 : vector<16x1xf32> to vector<1x16x1xf32>
    %cst_9 = arith.constant dense<0.000000e+00> : vector<1xf32>
    %29 = vector.multi_reduction <add>, %28, %cst_9 [1, 2] : vector<1x16x1xf32> to vector<1xf32>
    %30 = vector.shape_cast %29 : vector<1xf32> to vector<1x1x1xf32>
    %31 = vector.extract %30[0, 0, 0] : f32 from vector<1x1x1xf32>
    %32 = vector.broadcast %31 : f32 to vector<1x8x128xf32>
    %c0_10 = arith.constant 0 : index
    %c0_11 = arith.constant 0 : index
    %c0_12 = arith.constant 0 : index
    %33 = vector.load %arg3[%c0_10, %c0_11, %c0_12] : memref<1x8x128xf32, #tpu.memory_space<vmem>>, vector<1x8x128xf32>
    tpu.vector_store %arg3[%c0_10, %c0_11, %c0_12], %32 {strides = array<i32>} : memref<1x8x128xf32, #tpu.memory_space<vmem>>, vector<1x8x128xf32>,
    return
  }
  func.func @transform_0(%arg0: i32) -> (i32, i32) {
    %c0_i32 = arith.constant 0 : i32
    %c0_i32_0 = arith.constant 0 : i32
    return %arg0, %c0_i32 : i32, i32
  }
  func.func @transform_1(%arg0: i32) -> (i32, i32) {
    %c0_i32 = arith.constant 0 : i32
    %c0_i32_0 = arith.constant 0 : i32
    return %arg0, %c0_i32 : i32, i32
  }
  func.func @transform_2(%arg0: i32) -> (i32, i32, i32) {
    %c0_i32 = arith.constant 0 : i32
    %c0_i32_0 = arith.constant 0 : i32
    %c0_i32_1 = arith.constant 0 : i32
    return %arg0, %c0_i32, %c0_i32_0 : i32, i32, i32
  }
}

</mosaic_0001>

<llo_original>
// kernel: tpu_custom_call.1
$region0: #{tpu_custom_call.1}
  #allocation0 [shape = 'u32[]', space=smem, size = 0x4, offset = 0x4, fixed_abs, tag = 'smem constant byte address 0x4 - core index']
  #allocation1 [shape = 'u32[144,128]{1,0:T(1,128)}', space=vmem, size = 0x12000, scoped, tag = 'internal scratch']
  %s0 = inlined_call_operand.vmem [shape: f32[16,128], index: 0, kind: input, shape index: {}]
  %s1 = inlined_call_operand.vmem [shape: s32[16,1], index: 1, kind: input, shape index: {}]
  %s2 = inlined_call_operand.hbm [shape: f32[1,8,128], index: 2, kind: output, shape index: {}]
  %s3 = sld [smem:[#allocation0]]
  $region18: #{tpu_custom_call.1} parent=0
    _
  %s5 = ssub.s32 1, %s3
  %s6 = scalar_select 0, %s5, %s3
  $region1: #{tpu_custom_call.1} parent=0
    #allocation2 [shape = 'u8[4096]{0}', space=vmem, size = 0x1000, scoped, tag = 'output window, operand 0, single buffered']
    #allocation3 [shape = 's32[1]{0}', space=sflag, size = 0x4, scoped, tag = 'scoped memory for tpu_custom_call.1']
    %7 = vsyncpa [#allocation3], 0
    // Predicated region
    $region2: #{tpu_custom_call.1} parent=1 // pred_check
      _
    $region3: #{tpu_custom_call.1} parent=1 // pred_check_branch
      %9 = sbr.rel (0) target = $region5
    $region4: #{tpu_custom_call.1} parent=1 // pred_region
      _
    $region5: #{tpu_custom_call.1} parent=1 // pred_fallthru
      _
    // Predicated region
    $region6: #{tpu_custom_call.1} parent=1 // pred_check
      _
    $region7: #{tpu_custom_call.1} parent=1 // pred_check_branch
      %11 = sbr.rel (0) target = $region9
    $region8: #{tpu_custom_call.1} parent=1 // pred_region
      _
    $region9: #{tpu_custom_call.1} parent=1 // pred_fallthru
      _
    %v12 = vld [vmem:[%s0] sm:$0xff]
    %v13 = vld [vmem:[%s0 + $0x8] sm:$0xff]
    %14 = vmax.xlane.f32.xlu0 %v12
    %v15 = vpop.xlane.xlu0 %14
    %16 = vmax.xlane.f32.xlu0 %v13
    %v17 = vpop.xlane.xlu0 %16
    %v18 = vsub.f32 %v12, %v15
    %v19 = vsub.f32 %v13, %v17
    %v20 = vmul.f32 %v18, 1.442695
    %v21 = vpow.pop %v20
    %v22 = vmul.f32 %v19, 1.442695
    %v23 = vpow.pop %v22
    %24 = vadd.xlane.f32.xlu0 %v21
    %v25 = vpop.xlane.xlu0 %24
    %26 = vadd.xlane.f32.xlu0 %v23
    %v27 = vpop.xlane.xlu0 %26
    %v28 = vlaneseq
    %v29 = vand.u32 %v28, 127
    %v30 = vld [vmem:[%s1] sm:$0xff]
    %v31 = vld [vmem:[%s1 + $0x8] sm:$0xff]
    %32 = vset.pattern.permute.xlu0 0
    %33 = vperm.xlu0 %32, %v30
    %v34 = vpop.permute.xlu0 %33
    %35 = vset.pattern.permute.xlu0 0
    %36 = vperm.xlu0 %35, %v31
    %v37 = vpop.permute.xlu0 %36
    %vm38 = vcmp.eq.s32.totalorder %v29, %v34
    %vm39 = vcmp.eq.s32.totalorder %v29, %v37
    %v40 = vsel %vm38, 0.9007813, 0.00078125
    %v41 = vsel %vm39, 0.9007813, 0.00078125
    %v42 = vmul.f32 %v18, %v40
    %v43 = vmul.f32 %v19, %v41
    %44 = vadd.xlane.f32.xlu0 %v42
    %v45 = vpop.xlane.xlu0 %44
    %46 = vadd.xlane.f32.xlu0 %v43
    %v47 = vpop.xlane.xlu0 %46
    %v48 = vlog2.pop %v25
    %v49 = vmul.f32 %v48, 0.6931472
    %v50 = vlog2.pop %v27
    %v51 = vmul.f32 %v50, 0.6931472
    %v52 = vsub.f32 %v49, %v45
    %v53 = vsub.f32 %v51, %v47
    %s54 = smul.u32 0, 16
    %v55 = vlaneseq
    %v56 = vshrl.u32 %v55, 7
    %v57 = vadd.s32 %v56, 8
    %v58 = vstv %s54
    %v59 = vadd.s32 %v58, %v56
    %v60 = vadd.s32 %v58, %v57
    %vm61 = vcmp.lt.s32.totalorder %v59, 16
    %vm62 = vcmp.lt.s32.totalorder %v60, 16
    %v63 = vsel %vm61, %v52, 0.0
    %v64 = vsel %vm62, %v53, 0.0
    %vm65 = vcmask 7168
    %v66 = vsel %vm65, %v63, 0.0
    %v67 = vsel %vm65, %v64, 0.0
    %v68 = vadd.f32 %v66, %v67
    %69 = vadd.xlane.f32.xlu0 %v68
    %v70 = vpop.xlane.xlu0 %69
    %v71 = vrot.slane %v70, 4
    %v72 = vadd.f32 %v70, %v71
    %v73 = vrot.slane %v72, 2
    %v74 = vadd.f32 %v72, %v73
    %v75 = vrot.slane %v74, 1
    %v76 = vadd.f32 %v74, %v75
    %s77 = vtos %v76
    %v78 = vstv %s77
    %79 = vst [vmem:[#allocation2] sm:$0xff] %v78
    // Predicated region
    $region10: #{tpu_custom_call.1} parent=1 // pred_check
      _
    $region11: #{tpu_custom_call.1} parent=1 // pred_check_branch
      %81 = sbr.rel (0) target = $region13
    $region12: #{tpu_custom_call.1} parent=1 // pred_region
      %s83 = ssub.s32 128, 128
      %84 = vsyncadd [#allocation3], %s83
      %s86 = sshll.u32 [#allocation2], 4
      %s87 = int_to_ptr.vmem [resolvable:$true] %s86
      %89 = dma.vmem_to_hbm [thread:$0]  %s87, 128, %s2, [#allocation3]
    $region13: #{tpu_custom_call.1} parent=1 // pred_fallthru
      _
    // Predicated region
    $region14: #{tpu_custom_call.1} parent=1 // pred_check
      _
    $region15: #{tpu_custom_call.1} parent=1 // pred_check_branch
      %91 = sbr.rel (0) target = $region17
    $region16: #{tpu_custom_call.1} parent=1 // pred_region
      %92 = dma.done [#allocation3], 128
    $region17: #{tpu_custom_call.1} parent=1 // pred_fallthru
      _
    %93 = vsyncpa [#allocation3], 1

</llo_original>
